<compile_context>
chip_gen: v7x
topology: tpu7x:2x2x1
jax: 0.10.0
libtpu: 0.0.40
codegen_flags: <defaults>
</compile_context>

<pallas_src>
import functools

import jax
import jax.numpy as jnp
from jax.experimental import pallas as pl
from jax.experimental.pallas import tpu as pltpu


def _mlp_kernel(x_ref, w1t_ref, b1_ref, w2t_ref, b2_ref, o_ref):
    # Per-tile shapes (batch on sublanes, features/hidden/output on lanes):
    #   x_ref:   (block_b, n_feature)   native layout, contiguous HBM chunk
    #   w1t_ref: (n_feature, n_hidden)  hidden weights, pre-transposed (in, out)
    #   b1_ref:  (1, n_hidden)
    #   w2t_ref: (n_hidden, n_output)   output weights, pre-transposed (in, out)
    #   b2_ref:  (1, n_output)
    #   o_ref:   (block_b, n_output)    native layout, direct store
    x = x_ref[...]
    w1t = w1t_ref[...]
    n_feature = w1t.shape[0]

    # Hidden layer: K = n_feature (2). A K=2 contraction would waste a full
    # MXU pass, so accumulate it as broadcast multiply-adds on the VPU
    # (statically unrolled, tiny).
    h = x[:, 0:1] * w1t[0:1, :]
    for f in range(1, n_feature):
        h = h + x[:, f:f + 1] * w1t[f:f + 1, :]
    h = jnp.maximum(h + b1_ref[...], 0.0)          # bias + ReLU on the VPU

    # Output layer: K = n_hidden (32) -> one MXU matmul, f32 accumulation.
    y = jnp.dot(h, w2t_ref[...], preferred_element_type=jnp.float32) + b2_ref[...]
    o_ref[...] = y.astype(o_ref.dtype)


@functools.partial(jax.jit, static_argnames=("block_b",))
def _net_forward_impl(x, w1, b1, w2, b2, *, block_b):
    B, n_feature = x.shape
    n_hidden = w1.shape[0]
    n_output = w2.shape[0]

    # Only parameter-sized re-layouts happen in the wrapper (hundreds of
    # bytes); all batch-sized data is consumed/produced in native layout by
    # the kernel itself.
    w1t = w1.T                                    # (n_feature, n_hidden)
    w2t = w2.T                                    # (n_hidden, n_output)
    b1_2d = b1.reshape(1, n_hidden)
    b2_2d = b2.reshape(1, n_output)

    grid = (pl.cdiv(B, block_b),)                 # partial last tile is masked

    return pl.pallas_call(
        _mlp_kernel,
        out_shape=jax.ShapeDtypeStruct((B, n_output), jnp.float32),
        grid_spec=pltpu.PrefetchScalarGridSpec(
            num_scalar_prefetch=0,
            grid=grid,
            in_specs=[
                # activations: one native-layout batch tile per grid step
                pl.BlockSpec((block_b, n_feature), lambda i: (i, 0)),
                # parameters: full arrays, constant block index -> resident,
                # never re-DMA'd across grid steps
                pl.BlockSpec((n_feature, n_hidden), lambda i: (0, 0)),
                pl.BlockSpec((1, n_hidden), lambda i: (0, 0)),
                pl.BlockSpec((n_hidden, n_output), lambda i: (0, 0)),
                pl.BlockSpec((1, n_output), lambda i: (0, 0)),
            ],
            out_specs=pl.BlockSpec((block_b, n_output), lambda i: (i, 0)),
        ),
        compiler_params=pltpu.CompilerParams(
            dimension_semantics=("parallel",),
        ),
    )(x, w1t, b1_2d, w2t, b2_2d)


def _choose_block_b(B):
    if B <= 128:
        return B        # single full tile (block == array dim, no constraint issue)
    if B <= 1024:
        return 128      # >= 2 grid steps so both v7x TCs get work; tiny tail waste
    return 256          # fatter tiles for big batches; h=(256,32) f32 stays modest


def net_forward(x, w1, b1, w2, b2, *, block_b=None):
    """x: (B, n_feature) f32; weights in PyTorch layout (out, in), biases (out,).

    Returns (B, n_output) f32 pre-softmax logits == out(relu(hidden(x))).
    """
    B = x.shape[0]
    if block_b is None:
        block_b = _choose_block_b(B)
    return _net_forward_impl(x, w1, b1, w2, b2, block_b=int(block_b))


def init_params(key, n_feature, n_hidden, n_output):
    """torch.nn.Linear-style init: U(-1/sqrt(fan_in), +1/sqrt(fan_in)), torch layouts."""
    k1, k2, k3, k4 = jax.random.split(key, 4)
    bound1 = 1.0 / jnp.sqrt(n_feature)
    bound2 = 1.0 / jnp.sqrt(n_hidden)
    w1 = jax.random.uniform(k1, (n_hidden, n_feature), jnp.float32, -bound1, bound1)
    b1 = jax.random.uniform(k2, (n_hidden,), jnp.float32, -bound1, bound1)
    w2 = jax.random.uniform(k3, (n_output, n_hidden), jnp.float32, -bound2, bound2)
    b2 = jax.random.uniform(k4, (n_output,), jnp.float32, -bound2, bound2)
    return w1, b1, w2, b2


if __name__ == "__main__":
    # Shapes consistent with the original script: two clusters of 100 2-D
    # points (batch 200), hidden width 32, 2 output classes.
    n_feature, n_hidden, n_output = 2, 32, 2

    key = jax.random.PRNGKey(0)
    k0, k1, kp = jax.random.split(key, 3)

    data = jnp.ones((100, 2), jnp.float32)
    x0 = 2.0 * data + jax.random.normal(k0, (100, 2), jnp.float32)
    x1 = -2.0 * data + jax.random.normal(k1, (100, 2), jnp.float32)
    x = jnp.concatenate([x0, x1], axis=0)          # (200, 2)

    w1, b1, w2, b2 = init_params(kp, n_feature, n_hidden, n_output)

    y = net_forward(x, w1, b1, w2, b2)
    jax.block_until_ready(y)

    # reference check in plain JAX (PyTorch Linear semantics: x @ W.T + b)
    ref = jnp.maximum(x @ w1.T + b1, 0.0) @ w2.T + b2
    assert y.shape == (x.shape[0], n_output)
    assert jnp.allclose(y, ref, atol=1e-5), "mismatch vs reference"

    print("KERNEL_OK")
</pallas_src>

<mosaic_0001>
module attributes {stable_mosaic.version = 11 : i64} {
  func.func @_mlp_kernel(%arg0: i32, %arg1: memref<128x2xf32, #tpu.memory_space<vmem>>, %arg2: memref<2x32xf32, #tpu.memory_space<vmem>>, %arg3: memref<1x32xf32, #tpu.memory_space<vmem>>, %arg4: memref<32x2xf32, #tpu.memory_space<vmem>>, %arg5: memref<1x2xf32, #tpu.memory_space<vmem>>, %arg6: memref<128x2xf32, #tpu.memory_space<vmem>>) attributes {dimension_semantics = [#tpu.dimension_semantics<parallel>], iteration_bounds = array<i64: 2>, scalar_prefetch = 0 : i64, scratch_operands = 0 : i64, tpu.core_type = #tpu.core_type<tc>, window_params = [{transform_indices = @transform_0, window_bounds = array<i64: 128, 2>}, {pipeline_mode = #tpu.pipeline_mode<synchronous>, transform_indices = @transform_1, window_bounds = array<i64: 2, 32>}, {pipeline_mode = #tpu.pipeline_mode<synchronous>, transform_indices = @transform_2, window_bounds = array<i64: 1, 32>}, {pipeline_mode = #tpu.pipeline_mode<synchronous>, transform_indices = @transform_3, window_bounds = array<i64: 32, 2>}, {pipeline_mode = #tpu.pipeline_mode<synchronous>, transform_indices = @transform_4, window_bounds = array<i64: 1, 2>}, {transform_indices = @transform_5, window_bounds = array<i64: 128, 2>}]} {
    %c0 = arith.constant 0 : index
    %c0_0 = arith.constant 0 : index
    %0 = vector.load %arg1[%c0, %c0_0] : memref<128x2xf32, #tpu.memory_space<vmem>>, vector<128x2xf32>
    %c0_1 = arith.constant 0 : index
    %c0_2 = arith.constant 0 : index
    %1 = vector.load %arg2[%c0_1, %c0_2] : memref<2x32xf32, #tpu.memory_space<vmem>>, vector<2x32xf32>
    %2 = vector.extract_strided_slice %0 {offsets = [0, 0], sizes = [128, 1], strides = [1, 1]} : vector<128x2xf32> to vector<128x1xf32>
    %3 = vector.extract_strided_slice %1 {offsets = [0, 0], sizes = [1, 32], strides = [1, 1]} : vector<2x32xf32> to vector<1x32xf32>
    %4 = vector.broadcast %2 : vector<128x1xf32> to vector<128x32xf32>
    %5 = vector.broadcast %3 : vector<1x32xf32> to vector<128x32xf32>
    %6 = arith.mulf %4, %5 : vector<128x32xf32>
    %7 = vector.extract_strided_slice %0 {offsets = [0, 1], sizes = [128, 1], strides = [1, 1]} : vector<128x2xf32> to vector<128x1xf32>
    %8 = vector.extract_strided_slice %1 {offsets = [1, 0], sizes = [1, 32], strides = [1, 1]} : vector<2x32xf32> to vector<1x32xf32>
    %9 = vector.broadcast %7 : vector<128x1xf32> to vector<128x32xf32>
    %10 = vector.broadcast %8 : vector<1x32xf32> to vector<128x32xf32>
    %11 = arith.mulf %9, %10 : vector<128x32xf32>
    %12 = arith.addf %6, %11 : vector<128x32xf32>
    %c0_3 = arith.constant 0 : index
    %c0_4 = arith.constant 0 : index
    %13 = vector.load %arg3[%c0_3, %c0_4] : memref<1x32xf32, #tpu.memory_space<vmem>>, vector<1x32xf32>
    %14 = vector.broadcast %13 : vector<1x32xf32> to vector<128x32xf32>
    %15 = arith.addf %12, %14 : vector<128x32xf32>
    %cst = arith.constant 0.000000e+00 : f32
    %16 = vector.broadcast %cst : f32 to vector<128x32xf32>
    %17 = arith.maximumf %15, %16 : vector<128x32xf32>
    %c0_5 = arith.constant 0 : index
    %c0_6 = arith.constant 0 : index
    %18 = vector.load %arg4[%c0_5, %c0_6] : memref<32x2xf32, #tpu.memory_space<vmem>>, vector<32x2xf32>
    %cst_7 = arith.constant dense<0.000000e+00> : vector<128x2xf32>
    %19 = tpu.matmul %17, %18, %cst_7 {dimension_numbers = #tpu.dot_dimension_numbers<[1], [0], [0], [1], [0, 0, 1, 1], [], []>} : vector<128x32xf32>, vector<32x2xf32>, vector<128x2xf32> -> vector<128x2xf32>
    %c0_8 = arith.constant 0 : index
    %c0_9 = arith.constant 0 : index
    %20 = vector.load %arg5[%c0_8, %c0_9] : memref<1x2xf32, #tpu.memory_space<vmem>>, vector<1x2xf32>
    %21 = vector.broadcast %20 : vector<1x2xf32> to vector<128x2xf32>
    %22 = arith.addf %19, %21 : vector<128x2xf32>
    %c0_10 = arith.constant 0 : index
    %c0_11 = arith.constant 0 : index
    %23 = vector.load %arg6[%c0_10, %c0_11] : memref<128x2xf32, #tpu.memory_space<vmem>>, vector<128x2xf32>
    tpu.vector_store %arg6[%c0_10, %c0_11], %22 {strides = array<i32>} : memref<128x2xf32, #tpu.memory_space<vmem>>, vector<128x2xf32>,
    return
  }
  func.func @transform_0(%arg0: i32) -> (i32, i32) {
    %c0_i32 = arith.constant 0 : i32
    %c0_i32_0 = arith.constant 0 : i32
    return %arg0, %c0_i32 : i32, i32
  }
  func.func @transform_1(%arg0: i32) -> (i32, i32) {
    %c0_i32 = arith.constant 0 : i32
    %c0_i32_0 = arith.constant 0 : i32
    %c0_i32_1 = arith.constant 0 : i32
    return %c0_i32, %c0_i32_0 : i32, i32
  }
  func.func @transform_2(%arg0: i32) -> (i32, i32) {
    %c0_i32 = arith.constant 0 : i32
    %c0_i32_0 = arith.constant 0 : i32
    %c0_i32_1 = arith.constant 0 : i32
    return %c0_i32, %c0_i32_0 : i32, i32
  }
  func.func @transform_3(%arg0: i32) -> (i32, i32) {
    %c0_i32 = arith.constant 0 : i32
    %c0_i32_0 = arith.constant 0 : i32
    %c0_i32_1 = arith.constant 0 : i32
    return %c0_i32, %c0_i32_0 : i32, i32
  }
  func.func @transform_4(%arg0: i32) -> (i32, i32) {
    %c0_i32 = arith.constant 0 : i32
    %c0_i32_0 = arith.constant 0 : i32
    %c0_i32_1 = arith.constant 0 : i32
    return %c0_i32, %c0_i32_0 : i32, i32
  }
  func.func @transform_5(%arg0: i32) -> (i32, i32) {
    %c0_i32 = arith.constant 0 : i32
    %c0_i32_0 = arith.constant 0 : i32
    return %arg0, %c0_i32 : i32, i32
  }
}

</mosaic_0001>

<llo_original>
// kernel: _net_forward_impl.1
$region0: #{_net_forward_impl.1}
  #allocation0 [shape = 'u32[]', space=smem, size = 0x4, offset = 0x4, fixed_abs, tag = 'smem constant byte address 0x4 - core index']
  #allocation1 [shape = 'u32[144,128]{1,0:T(1,128)}', space=vmem, size = 0x12000, scoped, tag = 'internal scratch']
  %s0 = inlined_call_operand.vmem [shape: f32[200,2], index: 0, kind: input, shape index: {}]
  %s1 = inlined_call_operand.vmem [shape: f32[2,32], index: 1, kind: input, shape index: {}]
  %s2 = inlined_call_operand.vmem [shape: f32[1,32], index: 2, kind: input, shape index: {}]
  %s3 = inlined_call_operand.vmem [shape: f32[32,2], index: 3, kind: input, shape index: {}]
  %s4 = inlined_call_operand.vmem [shape: f32[1,2], index: 4, kind: input, shape index: {}]
  %s5 = inlined_call_operand.vmem [shape: f32[200,2], index: 5, kind: output, shape index: {}]
  %s6 = sld [smem:[#allocation0]]
  $region101: #{_net_forward_impl.1} parent=0
    _
  %s8 = ssub.s32 1, %s6
  %s9 = scalar_select 0, %s8, %s6
  $region1: #{_net_forward_impl.1} parent=0
    #allocation2 [shape = 'u8[131072]{0}', space=vmem, size = 0x20000, scoped, tag = 'output window, operand 0']
    loop: start=0, step=1, limit=4
    $region2: #{_net_forward_impl.1} parent=1 // loop_pre_header
      _
    $region3: #{_net_forward_impl.1} parent=1 // loop_header
      %s11 = sphi 0, %s15
      %p12 = scmp.ge.s32.totalorder %s11, 4
      %s21 = sphi 0, %s23
      %s24 = sphi 0, %s21
      %s25 = sphi 0, %s24
      %s41 = sphi 0, %s25
      %s45 = sphi 0, %s45
      %s47 = sphi 0, %s45
      %s48 = sphi 0, %s47
      %s62 = sphi 0, %s48
      %s66 = sphi 0, %s66
      %s68 = sphi 0, %s66
      %s69 = sphi 0, %s68
      %s83 = sphi 0, %s69
      %s87 = sphi 0, %s87
      %s89 = sphi 0, %s87
      %s90 = sphi 0, %s89
      %s104 = sphi 0, %s90
      %s108 = sphi 0, %s108
      %s110 = sphi 0, %s108
      %s111 = sphi 0, %s110
      %s125 = sphi 0, %s111
      %s131 = sphi 0, %s133
      %s134 = sphi 0, %s131
      %s135 = sphi 0, %s134
      %s151 = sphi 0, %s135
    $region4: #{_net_forward_impl.1} parent=1 // loop_header_branch
      %14 = sbr.rel (%p12) target = $region8
    $region5: #{_net_forward_impl.1} parent=1 // loop_body
      %s16 = ssub.s32 %s11, 1
      %s17 = ssub.s32 %s11, 2
      %s18 = sadd.s32 %s11, 1
      %s19 = ssub.s32 %s11, %s18
      %p20 = scmp.eq.s32.totalorder %s19, 0
      %s22 = sadd.s32 %s21, 1
      %s23 = scalar_select %p20, %s21, %s22
      %p26 = pneg %p20
      %p27 = scmp.eq.s32.totalorder %s11, 1
      %p28 = por %p26, %p27
      %p29 = scmp.ne.s32.totalorder %s21, %s24
      %p30 = scmp.eq.s32.totalorder %s11, 0
      %p31 = por %p29, %p30
      %p32 = scmp.ne.s32.totalorder %s21, %s24
      %p33 = scmp.eq.s32.totalorder %s16, 1
      %p34 = por %p32, %p33
      %p35 = scmp.ne.s32.totalorder %s24, %s25
      %p36 = scmp.eq.s32.totalorder %s16, 0
      %p37 = por %p35, %p36
      %p38 = scmp.ne.s32.totalorder %s24, %s25
      %p39 = scmp.eq.s32.totalorder %s17, 1
      %p40 = por %p38, %p39
      %p42 = scmp.ne.s32.totalorder %s25, %s41
      %p43 = scmp.eq.s32.totalorder %s17, 0
      %p44 = por %p42, %p43
      %s46 = sadd.s32 %s45, 1
      %p49 = scmp.eq.s32.totalorder %s11, 1
      %p50 = scmp.ne.s32.totalorder %s45, %s47
      %p51 = scmp.eq.s32.totalorder %s11, 0
      %p52 = por %p50, %p51
      %p53 = scmp.ne.s32.totalorder %s45, %s47
      %p54 = scmp.eq.s32.totalorder %s16, 1
      %p55 = por %p53, %p54
      %p56 = scmp.ne.s32.totalorder %s47, %s48
      %p57 = scmp.eq.s32.totalorder %s16, 0
      %p58 = por %p56, %p57
      %p59 = scmp.ne.s32.totalorder %s47, %s48
      %p60 = scmp.eq.s32.totalorder %s17, 1
      %p61 = por %p59, %p60
      %p63 = scmp.ne.s32.totalorder %s48, %s62
      %p64 = scmp.eq.s32.totalorder %s17, 0
      %p65 = por %p63, %p64
      %s67 = sadd.s32 %s66, 1
      %p70 = scmp.eq.s32.totalorder %s11, 1
      %p71 = scmp.ne.s32.totalorder %s66, %s68
      %p72 = scmp.eq.s32.totalorder %s11, 0
      %p73 = por %p71, %p72
      %p74 = scmp.ne.s32.totalorder %s66, %s68
      %p75 = scmp.eq.s32.totalorder %s16, 1
      %p76 = por %p74, %p75
      %p77 = scmp.ne.s32.totalorder %s68, %s69
      %p78 = scmp.eq.s32.totalorder %s16, 0
      %p79 = por %p77, %p78
      %p80 = scmp.ne.s32.totalorder %s68, %s69
      %p81 = scmp.eq.s32.totalorder %s17, 1
      %p82 = por %p80, %p81
      %p84 = scmp.ne.s32.totalorder %s69, %s83
      %p85 = scmp.eq.s32.totalorder %s17, 0
      %p86 = por %p84, %p85
      %s88 = sadd.s32 %s87, 1
      %p91 = scmp.eq.s32.totalorder %s11, 1
      %p92 = scmp.ne.s32.totalorder %s87, %s89
      %p93 = scmp.eq.s32.totalorder %s11, 0
      %p94 = por %p92, %p93
      %p95 = scmp.ne.s32.totalorder %s87, %s89
      %p96 = scmp.eq.s32.totalorder %s16, 1
      %p97 = por %p95, %p96
      %p98 = scmp.ne.s32.totalorder %s89, %s90
      %p99 = scmp.eq.s32.totalorder %s16, 0
      %p100 = por %p98, %p99
      %p101 = scmp.ne.s32.totalorder %s89, %s90
      %p102 = scmp.eq.s32.totalorder %s17, 1
      %p103 = por %p101, %p102
      %p105 = scmp.ne.s32.totalorder %s90, %s104
      %p106 = scmp.eq.s32.totalorder %s17, 0
      %p107 = por %p105, %p106
      %s109 = sadd.s32 %s108, 1
      %p112 = scmp.eq.s32.totalorder %s11, 1
      %p113 = scmp.ne.s32.totalorder %s108, %s110
      %p114 = scmp.eq.s32.totalorder %s11, 0
      %p115 = por %p113, %p114
      %p116 = scmp.ne.s32.totalorder %s108, %s110
      %p117 = scmp.eq.s32.totalorder %s16, 1
      %p118 = por %p116, %p117
      %p119 = scmp.ne.s32.totalorder %s110, %s111
      %p120 = scmp.eq.s32.totalorder %s16, 0
      %p121 = por %p119, %p120
      %p122 = scmp.ne.s32.totalorder %s110, %s111
      %p123 = scmp.eq.s32.totalorder %s17, 1
      %p124 = por %p122, %p123
      %p126 = scmp.ne.s32.totalorder %s111, %s125
      %p127 = scmp.eq.s32.totalorder %s17, 0
      %p128 = por %p126, %p127
      %s129 = ssub.s32 %s11, %s18
      %p130 = scmp.eq.s32.totalorder %s129, 0
      %s132 = sadd.s32 %s131, 1
      %s133 = scalar_select %p130, %s131, %s132
      %p136 = pneg %p130
      %p137 = scmp.eq.s32.totalorder %s11, 1
      %p138 = por %p136, %p137
      %p139 = scmp.ne.s32.totalorder %s131, %s134
      %p140 = scmp.eq.s32.totalorder %s11, 0
      %p141 = por %p139, %p140
      %p142 = scmp.ne.s32.totalorder %s131, %s134
      %p143 = scmp.eq.s32.totalorder %s16, 1
      %p144 = por %p142, %p143
      %p145 = scmp.ne.s32.totalorder %s134, %s135
      %p146 = scmp.eq.s32.totalorder %s16, 0
      %p147 = por %p145, %p146
      %p148 = scmp.ne.s32.totalorder %s134, %s135
      %p149 = scmp.eq.s32.totalorder %s17, 1
      %p150 = por %p148, %p149
      %p152 = scmp.ne.s32.totalorder %s135, %s151
      %p153 = scmp.eq.s32.totalorder %s17, 0
      %p154 = por %p152, %p153
      %p155 = scmp.le.s32.totalorder 1, %s11
      %p156 = scmp.lt.s32.totalorder %s11, 3
      %p157 = pnand %p155, %p156
      %p158 = pneg %p157
      // Predicated region
      $region9: #{_net_forward_impl.1} parent=5 // pred_check
        _
      $region10: #{_net_forward_impl.1} parent=5 // pred_check_branch
        %160 = sbr.rel (%p157) target = $region12
      $region11: #{_net_forward_impl.1} parent=5 // pred_region
        %s161 = ssub.s32 %s11, 1
        // Predicated region
        $region13: #{_net_forward_impl.1} parent=11 // pred_check
          %p162 = pneg %p58
        $region14: #{_net_forward_impl.1} parent=11 // pred_check_branch
          %164 = sbr.rel (%p162) target = $region16
        $region15: #{_net_forward_impl.1} parent=11 // pred_region
          _
        $region16: #{_net_forward_impl.1} parent=11 // pred_fallthru
          _
        // Predicated region
        $region17: #{_net_forward_impl.1} parent=11 // pred_check
          %p165 = pneg %p79
        $region18: #{_net_forward_impl.1} parent=11 // pred_check_branch
          %167 = sbr.rel (%p165) target = $region20
        $region19: #{_net_forward_impl.1} parent=11 // pred_region
          _
        $region20: #{_net_forward_impl.1} parent=11 // pred_fallthru
          _
        // Predicated region
        $region21: #{_net_forward_impl.1} parent=11 // pred_check
          %p168 = pneg %p100
        $region22: #{_net_forward_impl.1} parent=11 // pred_check_branch
          %170 = sbr.rel (%p168) target = $region24
        $region23: #{_net_forward_impl.1} parent=11 // pred_region
          _
        $region24: #{_net_forward_impl.1} parent=11 // pred_fallthru
          _
        // Predicated region
        $region25: #{_net_forward_impl.1} parent=11 // pred_check
          %p171 = pneg %p121
        $region26: #{_net_forward_impl.1} parent=11 // pred_check_branch
          %173 = sbr.rel (%p171) target = $region28
        $region27: #{_net_forward_impl.1} parent=11 // pred_region
          _
        $region28: #{_net_forward_impl.1} parent=11 // pred_fallthru
          _
      $region12: #{_net_forward_impl.1} parent=5 // pred_fallthru
        _
      %p174 = scmp.lt.s32.totalorder %s11, 2
      // Predicated region
      $region29: #{_net_forward_impl.1} parent=5 // pred_check
        %p175 = pneg %p174
      $region30: #{_net_forward_impl.1} parent=5 // pred_check_branch
        %177 = sbr.rel (%p175) target = $region32
      $region31: #{_net_forward_impl.1} parent=5 // pred_region
        // Predicated region
        $region33: #{_net_forward_impl.1} parent=31 // pred_check
          %p178 = pneg %p31
        $region34: #{_net_forward_impl.1} parent=31 // pred_check_branch
          %180 = sbr.rel (%p178) target = $region36
        $region35: #{_net_forward_impl.1} parent=31 // pred_region
          %s181 = smul.u32 16, %s11
          %s182 = ssub.s32 25, %s181
          %p183 = scmp.lt.s32.totalorder %s182, 16
          %s184 = scalar_select %p183, %s182, 16
          %s185 = smul.u32 128, %s184
          %p186 = scmp.lt.s32.totalorder %s181, 24
          %s187 = scalar_select %p186, %s181, 24
          %s188 = smul.addr %s187, 8
          %s189 = scalar_lea.vmem %s0, %s188
          %s190 = smul.u32 16, %s11
          %s191 = ssub.s32 25, %s190
          %p192 = scmp.lt.s32.totalorder %s191, 16
          %s193 = scalar_select %p192, %s191, 16
          %s194 = smul.u32 128, %s193
        $region36: #{_net_forward_impl.1} parent=31 // pred_fallthru
          _
      $region32: #{_net_forward_impl.1} parent=5 // pred_fallthru
        _
      %p195 = scmp.le.s32.totalorder 1, %s11
      %p196 = scmp.lt.s32.totalorder %s11, 3
      %p197 = pnand %p195, %p196
      %p198 = pneg %p197
      // Predicated region
      $region37: #{_net_forward_impl.1} parent=5 // pred_check
        _
      $region38: #{_net_forward_impl.1} parent=5 // pred_check_branch
        %200 = sbr.rel (%p197) target = $region40
      $region39: #{_net_forward_impl.1} parent=5 // pred_region
        %s201 = ssub.s32 %s11, 1
        %s202 = smul.u32 16, %s16
        %s203 = ssub.s32 25, %s202
        %p204 = scmp.lt.s32.totalorder %s203, 16
        %s205 = scalar_select %p204, %s203, 16
        %s206 = smul.u32 128, %s205
        %p207 = scmp.lt.s32.totalorder %s202, 24
        %s208 = scalar_select %p207, %s202, 24
        %s209 = smul.addr %s208, 8
        %s210 = scalar_lea.vmem %s0, %s209
        %p211 = pneg %p37
        %p212 = pneg %p34
        %p213 = pneg %p58
        %p214 = pneg %p55
        %p215 = pneg %p79
        %p216 = pneg %p76
        %p217 = pneg %p100
        %p218 = pneg %p97
        %p219 = pneg %p121
        %p220 = pneg %p118
        %p221 = pneg %p147
        %p222 = pneg %p144
        %s223 = sand.u32 %s134, 1
        %s224 = sand.u32 %s134, 1
        %s225 = smul.addr %s224, 128
        %s226 = scalar_lea.vmem [#allocation2], %s225
        %s227 = smul.u32 16, %s16
        %s228 = ssub.s32 25, %s227
        %p229 = scmp.lt.s32.totalorder %s228, 16
        %s230 = scalar_select %p229, %s228, 16
        %s231 = smul.u32 128, %s230
        %p232 = scmp.lt.s32.totalorder %s227, 24
        %s233 = scalar_select %p232, %s227, 24
        %s234 = smul.addr %s233, 8
        %s235 = scalar_lea.vmem %s0, %s234
        %s236 = smul.u32 16, %s16
        %s237 = ssub.s32 25, %s236
        %p238 = scmp.lt.s32.totalorder %s237, 16
        %s239 = scalar_select %p238, %s237, 16
        %s240 = smul.u32 128, %s239
        %s241 = smul.u32 16, %s16
        %s242 = ssub.s32 25, %s241
        %p243 = scmp.lt.s32.totalorder %s242, 16
        %s244 = scalar_select %p243, %s242, 16
        %s245 = smul.u32 128, %s244
        %v246 = vld [vmem:[%s235] sm:$0xff]
        %v247 = vld [vmem:[%s235 + $0x8] sm:$0xff]
        %v248 = vld [vmem:[%s235 + $0x10] sm:$0xff]
        %v249 = vld [vmem:[%s235 + $0x18] sm:$0xff]
        %v250 = vld [vmem:[%s235 + $0x20] sm:$0xff]
        %v251 = vld [vmem:[%s235 + $0x28] sm:$0xff]
        %v252 = vld [vmem:[%s235 + $0x30] sm:$0xff]
        %v253 = vld [vmem:[%s235 + $0x38] sm:$0xff]
        %v254 = vld [vmem:[%s235 + $0x40] sm:$0xff]
        %v255 = vld [vmem:[%s235 + $0x48] sm:$0xff]
        %v256 = vld [vmem:[%s235 + $0x50] sm:$0xff]
        %v257 = vld [vmem:[%s235 + $0x58] sm:$0xff]
        %v258 = vld [vmem:[%s235 + $0x60] sm:$0xff]
        %v259 = vld [vmem:[%s235 + $0x68] sm:$0xff]
        %v260 = vld [vmem:[%s235 + $0x70] sm:$0xff]
        %v261 = vld [vmem:[%s235 + $0x78] sm:$0xff]
        %v262 = vld [vmem:[%s1] sm:$0x3]
        %264 = vset.pattern.permute.xlu0 0
        %265 = vperm.xlu0 %264, %v246
        %v266 = vpop.permute.xlu0 %265
        %269 = vset.pattern.permute.xlu0 0
        %270 = vperm.xlu0 %269, %v247
        %v271 = vpop.permute.xlu0 %270
        %274 = vset.pattern.permute.xlu0 0
        %275 = vperm.xlu0 %274, %v248
        %v276 = vpop.permute.xlu0 %275
        %279 = vset.pattern.permute.xlu0 0
        %280 = vperm.xlu0 %279, %v249
        %v281 = vpop.permute.xlu0 %280
        %284 = vset.pattern.permute.xlu0 0
        %285 = vperm.xlu0 %284, %v250
        %v286 = vpop.permute.xlu0 %285
        %289 = vset.pattern.permute.xlu0 0
        %290 = vperm.xlu0 %289, %v251
        %v291 = vpop.permute.xlu0 %290
        %294 = vset.pattern.permute.xlu0 0
        %295 = vperm.xlu0 %294, %v252
        %v296 = vpop.permute.xlu0 %295
        %299 = vset.pattern.permute.xlu0 0
        %300 = vperm.xlu0 %299, %v253
        %v301 = vpop.permute.xlu0 %300
        %304 = vset.pattern.permute.xlu0 0
        %305 = vperm.xlu0 %304, %v254
        %v306 = vpop.permute.xlu0 %305
        %309 = vset.pattern.permute.xlu0 0
        %310 = vperm.xlu0 %309, %v255
        %v311 = vpop.permute.xlu0 %310
        %314 = vset.pattern.permute.xlu0 0
        %315 = vperm.xlu0 %314, %v256
        %v316 = vpop.permute.xlu0 %315
        %319 = vset.pattern.permute.xlu0 0
        %320 = vperm.xlu0 %319, %v257
        %v321 = vpop.permute.xlu0 %320
        %324 = vset.pattern.permute.xlu0 0
        %325 = vperm.xlu0 %324, %v258
        %v326 = vpop.permute.xlu0 %325
        %329 = vset.pattern.permute.xlu0 0
        %330 = vperm.xlu0 %329, %v259
        %v331 = vpop.permute.xlu0 %330
        %334 = vset.pattern.permute.xlu0 0
        %335 = vperm.xlu0 %334, %v260
        %v336 = vpop.permute.xlu0 %335
        %339 = vset.pattern.permute.xlu0 0
        %340 = vperm.xlu0 %339, %v261
        %v341 = vpop.permute.xlu0 %340
        %v343 = vlaneseq
        %v344 = vshrl.u32 %v343, 7
        %v345 = vsub.s32 0, %v344
        %v346 = vrot.slane %v262, %v345
        %v347 = vmul.f32 %v266, %v346
        %v348 = vmul.f32 %v271, %v346
        %v349 = vmul.f32 %v276, %v346
        %v350 = vmul.f32 %v281, %v346
        %v351 = vmul.f32 %v286, %v346
        %v352 = vmul.f32 %v291, %v346
        %v353 = vmul.f32 %v296, %v346
        %v354 = vmul.f32 %v301, %v346
        %v355 = vmul.f32 %v306, %v346
        %v356 = vmul.f32 %v311, %v346
        %v357 = vmul.f32 %v316, %v346
        %v358 = vmul.f32 %v321, %v346
        %v359 = vmul.f32 %v326, %v346
        %v360 = vmul.f32 %v331, %v346
        %v361 = vmul.f32 %v336, %v346
        %v362 = vmul.f32 %v341, %v346
        %363 = vset.pattern.permute.xlu0 1
        %364 = vperm.xlu0 %363, %v246
        %v365 = vpop.permute.xlu0 %364
        %367 = vset.pattern.permute.xlu0 1
        %368 = vperm.xlu0 %367, %v247
        %v369 = vpop.permute.xlu0 %368
        %371 = vset.pattern.permute.xlu0 1
        %372 = vperm.xlu0 %371, %v248
        %v373 = vpop.permute.xlu0 %372
        %375 = vset.pattern.permute.xlu0 1
        %376 = vperm.xlu0 %375, %v249
        %v377 = vpop.permute.xlu0 %376
        %379 = vset.pattern.permute.xlu0 1
        %380 = vperm.xlu0 %379, %v250
        %v381 = vpop.permute.xlu0 %380
        %383 = vset.pattern.permute.xlu0 1
        %384 = vperm.xlu0 %383, %v251
        %v385 = vpop.permute.xlu0 %384
        %387 = vset.pattern.permute.xlu0 1
        %388 = vperm.xlu0 %387, %v252
        %v389 = vpop.permute.xlu0 %388
        %391 = vset.pattern.permute.xlu0 1
        %392 = vperm.xlu0 %391, %v253
        %v393 = vpop.permute.xlu0 %392
        %395 = vset.pattern.permute.xlu0 1
        %396 = vperm.xlu0 %395, %v254
        %v397 = vpop.permute.xlu0 %396
        %399 = vset.pattern.permute.xlu0 1
        %400 = vperm.xlu0 %399, %v255
        %v401 = vpop.permute.xlu0 %400
        %403 = vset.pattern.permute.xlu0 1
        %404 = vperm.xlu0 %403, %v256
        %v405 = vpop.permute.xlu0 %404
        %407 = vset.pattern.permute.xlu0 1
        %408 = vperm.xlu0 %407, %v257
        %v409 = vpop.permute.xlu0 %408
        %411 = vset.pattern.permute.xlu0 1
        %412 = vperm.xlu0 %411, %v258
        %v413 = vpop.permute.xlu0 %412
        %415 = vset.pattern.permute.xlu0 1
        %416 = vperm.xlu0 %415, %v259
        %v417 = vpop.permute.xlu0 %416
        %419 = vset.pattern.permute.xlu0 1
        %420 = vperm.xlu0 %419, %v260
        %v421 = vpop.permute.xlu0 %420
        %423 = vset.pattern.permute.xlu0 1
        %424 = vperm.xlu0 %423, %v261
        %v425 = vpop.permute.xlu0 %424
        %v427 = vlaneseq
        %v428 = vshrl.u32 %v427, 7
        %v429 = vsub.s32 1, %v428
        %v430 = vrot.slane %v262, %v429
        %v431 = vmul.f32 %v365, %v430
        %v432 = vmul.f32 %v369, %v430
        %v433 = vmul.f32 %v373, %v430
        %v434 = vmul.f32 %v377, %v430
        %v435 = vmul.f32 %v381, %v430
        %v436 = vmul.f32 %v385, %v430
        %v437 = vmul.f32 %v389, %v430
        %v438 = vmul.f32 %v393, %v430
        %v439 = vmul.f32 %v397, %v430
        %v440 = vmul.f32 %v401, %v430
        %v441 = vmul.f32 %v405, %v430
        %v442 = vmul.f32 %v409, %v430
        %v443 = vmul.f32 %v413, %v430
        %v444 = vmul.f32 %v417, %v430
        %v445 = vmul.f32 %v421, %v430
        %v446 = vmul.f32 %v425, %v430
        %v447 = vadd.f32 %v347, %v431
        %v448 = vadd.f32 %v348, %v432
        %v449 = vadd.f32 %v349, %v433
        %v450 = vadd.f32 %v350, %v434
        %v451 = vadd.f32 %v351, %v435
        %v452 = vadd.f32 %v352, %v436
        %v453 = vadd.f32 %v353, %v437
        %v454 = vadd.f32 %v354, %v438
        %v455 = vadd.f32 %v355, %v439
        %v456 = vadd.f32 %v356, %v440
        %v457 = vadd.f32 %v357, %v441
        %v458 = vadd.f32 %v358, %v442
        %v459 = vadd.f32 %v359, %v443
        %v460 = vadd.f32 %v360, %v444
        %v461 = vadd.f32 %v361, %v445
        %v462 = vadd.f32 %v362, %v446
        %v463 = vld [vmem:[%s2] sm:$0x1]
        %v465 = vlaneseq
        %v466 = vshrl.u32 %v465, 7
        %v467 = vsub.s32 0, %v466
        %v468 = vrot.slane %v463, %v467
        %v470 = vadd.f32 %v447, %v468
        %v471 = vadd.f32 %v448, %v468
        %v472 = vadd.f32 %v449, %v468
        %v473 = vadd.f32 %v450, %v468
        %v474 = vadd.f32 %v451, %v468
        %v475 = vadd.f32 %v452, %v468
        %v476 = vadd.f32 %v453, %v468
        %v477 = vadd.f32 %v454, %v468
        %v478 = vadd.f32 %v455, %v468
        %v479 = vadd.f32 %v456, %v468
        %v480 = vadd.f32 %v457, %v468
        %v481 = vadd.f32 %v458, %v468
        %v482 = vadd.f32 %v459, %v468
        %v483 = vadd.f32 %v460, %v468
        %v484 = vadd.f32 %v461, %v468
        %v485 = vadd.f32 %v462, %v468
        %v486 = vmax.f32 %v470, 0.0
        %v487 = vmax.f32 %v471, 0.0
        %v488 = vmax.f32 %v472, 0.0
        %v489 = vmax.f32 %v473, 0.0
        %v490 = vmax.f32 %v474, 0.0
        %v491 = vmax.f32 %v475, 0.0
        %v492 = vmax.f32 %v476, 0.0
        %v493 = vmax.f32 %v477, 0.0
        %v494 = vmax.f32 %v478, 0.0
        %v495 = vmax.f32 %v479, 0.0
        %v496 = vmax.f32 %v480, 0.0
        %v497 = vmax.f32 %v481, 0.0
        %v498 = vmax.f32 %v482, 0.0
        %v499 = vmax.f32 %v483, 0.0
        %v500 = vmax.f32 %v484, 0.0
        %v501 = vmax.f32 %v485, 0.0
        %v502 = vld [vmem:[%s3] sm:$0xff]
        %v503 = vld [vmem:[%s3 + $0x8] sm:$0xff]
        %v504 = vld [vmem:[%s3 + $0x10] sm:$0xff]
        %v505 = vld [vmem:[%s3 + $0x18] sm:$0xff]
        %v506 = vld [vmem:[%s4] sm:$0x1]
        %v508 = vlaneseq
        %v509 = vshrl.u32 %v508, 7
        %v510 = vsub.s32 0, %v509
        %v511 = vrot.slane %v506, %v510
        %vm513 = vcmask 261120
        %v515 = vsel %vm513, %v486, 0
        %v518 = vsel %vm513, %v487, 0
        %v521 = vsel %vm513, %v488, 0
        %v524 = vsel %vm513, %v489, 0
        %v527 = vsel %vm513, %v490, 0
        %v530 = vsel %vm513, %v491, 0
        %v533 = vsel %vm513, %v492, 0
        %v536 = vsel %vm513, %v493, 0
        %v539 = vsel %vm513, %v494, 0
        %v542 = vsel %vm513, %v495, 0
        %v545 = vsel %vm513, %v496, 0
        %v548 = vsel %vm513, %v497, 0
        %v551 = vsel %vm513, %v498, 0
        %v554 = vsel %vm513, %v499, 0
        %v557 = vsel %vm513, %v500, 0
        %v560 = vsel %vm513, %v501, 0
        %562 = vmatprep.subr.mxu0 0.0
        %563 = vmatpush1.msra.mxu0 %v502
        %564 = vmatprep.subr.mxu0 0.0
        %565 = vmatpush1.msra.mxu0 %v503
        %566 = vmatprep.subr.mxu0 0.0
        %567 = vmatpush1.msra.mxu0 %v504
        %568 = vmatprep.subr.mxu0 0.0
        %569 = vmatpush1.msra.mxu0 %v505
        %570 = vmatprep.subr.mxu0 0.0
        %571 = vmatpush1.msra.mxu0 0.0
        %572 = vmatprep.subr.mxu0 0.0
        %573 = vmatpush1.msra.mxu0 0.0
        %574 = vmatprep.subr.mxu0 0.0
        %575 = vmatpush1.msra.mxu0 0.0
        %576 = vmatprep.subr.mxu0 0.0
        %577 = vmatpush1.msra.mxu0 0.0
        %578 = vmatprep.subr.mxu0 0.0
        %579 = vmatpush1.msra.mxu0 0.0
        %580 = vmatprep.subr.mxu0 0.0
        %581 = vmatpush1.msra.mxu0 0.0
        %582 = vmatprep.subr.mxu0 0.0
        %583 = vmatpush1.msra.mxu0 0.0
        %584 = vmatprep.subr.mxu0 0.0
        %585 = vmatpush1.msra.mxu0 0.0
        %586 = vmatprep.subr.mxu0 0.0
        %587 = vmatpush1.msra.mxu0 0.0
        %588 = vmatprep.subr.mxu0 0.0
        %589 = vmatpush1.msra.mxu0 0.0
        %590 = vmatprep.subr.mxu0 0.0
        %591 = vmatpush1.msra.mxu0 0.0
        %592 = vmatprep.subr.mxu0 0.0
        %593 = vmatpush1.msra.mxu0 0.0
        %594 = vmatprep.subr.mxu0 0.0
        %595 = vmatpush1.msra.mxu0 0.0
        %596 = vmatprep.subr.mxu0 0.0
        %597 = vmatpush1.msra.mxu0 0.0
        %598 = vmatprep.subr.mxu0 0.0
        %599 = vmatpush1.msra.mxu0 0.0
        %600 = vmatprep.subr.mxu0 0.0
        %601 = vmatpush1.msra.mxu0 0.0
        %602 = vmatprep.subr.mxu0 0.0
        %603 = vmatpush1.msra.mxu0 0.0
        %604 = vmatprep.subr.mxu0 0.0
        %605 = vmatpush1.msra.mxu0 0.0
        %606 = vmatprep.subr.mxu0 0.0
        %607 = vmatpush1.msra.mxu0 0.0
        %608 = vmatprep.subr.mxu0 0.0
        %609 = vmatpush1.msra.mxu0 0.0
        %610 = vmatprep.subr.mxu0 0.0
        %611 = vmatpush1.msra.mxu0 0.0
        %612 = vmatprep.subr.mxu0 0.0
        %613 = vmatpush1.msra.mxu0 0.0
        %614 = vmatprep.subr.mxu0 0.0
        %615 = vmatpush1.msra.mxu0 0.0
        %616 = vmatprep.subr.mxu0 0.0
        %617 = vmatpush1.msra.mxu0 0.0
        %618 = vmatprep.subr.mxu0 0.0
        %619 = vmatpush1.msra.mxu0 0.0
        %620 = vmatprep.subr.mxu0 0.0
        %621 = vmatpush1.msra.mxu0 0.0
        %622 = vmatprep.subr.mxu0 0.0
        %623 = vmatpush1.msra.mxu0 0.0
        %624 = vmatprep.subr.mxu0 0.0
        %625 = vmatpush1.msra.mxu0 0.0
        %626 = vmatprep.mubr.f32.mxu0 0.0
        %627 = vmatmul.mubr.f32.gmra.mrb[0].mxu0 %v515
        %v628 = vpop.f32.mrb[0].mxu0
        %v629 = vadd.f32 %v511, %v628
        %v630 = vpop.f32.mrb[0].mxu0
        %631 = vmatprep.mubr.f32.mxu0 0.0
        %632 = vmatmul.mubr.f32.gmra.mrb[0].mxu0 %v518
        %v633 = vpop.f32.mrb[0].mxu0
        %v634 = vadd.f32 %v511, %v633
        %v635 = vpop.f32.mrb[0].mxu0
        %636 = vmatprep.mubr.f32.mxu0 0.0
        %637 = vmatmul.mubr.f32.gmra.mrb[0].mxu0 %v521
        %v638 = vpop.f32.mrb[0].mxu0
        %v639 = vadd.f32 %v511, %v638
        %v640 = vpop.f32.mrb[0].mxu0
        %641 = vmatprep.mubr.f32.mxu0 0.0
        %642 = vmatmul.mubr.f32.gmra.mrb[0].mxu0 %v524
        %v643 = vpop.f32.mrb[0].mxu0
        %v644 = vadd.f32 %v511, %v643
        %v645 = vpop.f32.mrb[0].mxu0
        %646 = vmatprep.mubr.f32.mxu0 0.0
        %647 = vmatmul.mubr.f32.gmra.mrb[0].mxu0 %v527
        %v648 = vpop.f32.mrb[0].mxu0
        %v649 = vadd.f32 %v511, %v648
        %v650 = vpop.f32.mrb[0].mxu0
        %651 = vmatprep.mubr.f32.mxu0 0.0
        %652 = vmatmul.mubr.f32.gmra.mrb[0].mxu0 %v530
        %v653 = vpop.f32.mrb[0].mxu0
        %v654 = vadd.f32 %v511, %v653
        %v655 = vpop.f32.mrb[0].mxu0
        %656 = vmatprep.mubr.f32.mxu0 0.0
        %657 = vmatmul.mubr.f32.gmra.mrb[0].mxu0 %v533
        %v658 = vpop.f32.mrb[0].mxu0
        %v659 = vadd.f32 %v511, %v658
        %v660 = vpop.f32.mrb[0].mxu0
        %661 = vmatprep.mubr.f32.mxu0 0.0
        %662 = vmatmul.mubr.f32.gmra.mrb[0].mxu0 %v536
        %v663 = vpop.f32.mrb[0].mxu0
        %v664 = vadd.f32 %v511, %v663
        %v665 = vpop.f32.mrb[0].mxu0
        %666 = vmatprep.mubr.f32.mxu0 0.0
        %667 = vmatmul.mubr.f32.gmra.mrb[0].mxu0 %v539
        %v668 = vpop.f32.mrb[0].mxu0
        %v669 = vadd.f32 %v511, %v668
        %v670 = vpop.f32.mrb[0].mxu0
        %671 = vmatprep.mubr.f32.mxu0 0.0
        %672 = vmatmul.mubr.f32.gmra.mrb[0].mxu0 %v542
        %v673 = vpop.f32.mrb[0].mxu0
        %v674 = vadd.f32 %v511, %v673
        %v675 = vpop.f32.mrb[0].mxu0
        %676 = vmatprep.mubr.f32.mxu0 0.0
        %677 = vmatmul.mubr.f32.gmra.mrb[0].mxu0 %v545
        %v678 = vpop.f32.mrb[0].mxu0
        %v679 = vadd.f32 %v511, %v678
        %v680 = vpop.f32.mrb[0].mxu0
        %681 = vmatprep.mubr.f32.mxu0 0.0
        %682 = vmatmul.mubr.f32.gmra.mrb[0].mxu0 %v548
        %v683 = vpop.f32.mrb[0].mxu0
        %v684 = vadd.f32 %v511, %v683
        %v685 = vpop.f32.mrb[0].mxu0
        %686 = vmatprep.mubr.f32.mxu0 0.0
        %687 = vmatmul.mubr.f32.gmra.mrb[0].mxu0 %v551
        %v688 = vpop.f32.mrb[0].mxu0
        %v689 = vadd.f32 %v511, %v688
        %v690 = vpop.f32.mrb[0].mxu0
        %691 = vmatprep.mubr.f32.mxu0 0.0
        %692 = vmatmul.mubr.f32.gmra.mrb[0].mxu0 %v554
        %v693 = vpop.f32.mrb[0].mxu0
        %v694 = vadd.f32 %v511, %v693
        %v695 = vpop.f32.mrb[0].mxu0
        %696 = vmatprep.mubr.f32.mxu0 0.0
        %697 = vmatmul.mubr.f32.gmra.mrb[0].mxu0 %v557
        %v698 = vpop.f32.mrb[0].mxu0
        %v699 = vadd.f32 %v511, %v698
        %v700 = vpop.f32.mrb[0].mxu0
        %701 = vmatprep.mubr.f32.mxu0 0.0
        %702 = vmatmul.mubr.f32.gmra.mrb[0].mxu0 %v560
        %v703 = vpop.f32.mrb[0].mxu0
        %v704 = vadd.f32 %v511, %v703
        %v705 = vpop.f32.mrb[0].mxu0
        %706 = vdwg.mxu0
        %vm707 = vcmask 15360
        %708 = vst.msk [vmem:[%s226] sm:$0xff] %vm707, %v629
        %709 = vst.msk [vmem:[%s226 + $0x8] sm:$0xff] %vm707, %v634
        %710 = vst.msk [vmem:[%s226 + $0x10] sm:$0xff] %vm707, %v639
        %711 = vst.msk [vmem:[%s226 + $0x18] sm:$0xff] %vm707, %v644
        %712 = vst.msk [vmem:[%s226 + $0x20] sm:$0xff] %vm707, %v649
        %713 = vst.msk [vmem:[%s226 + $0x28] sm:$0xff] %vm707, %v654
        %714 = vst.msk [vmem:[%s226 + $0x30] sm:$0xff] %vm707, %v659
        %715 = vst.msk [vmem:[%s226 + $0x38] sm:$0xff] %vm707, %v664
        %716 = vst.msk [vmem:[%s226 + $0x40] sm:$0xff] %vm707, %v669
        %717 = vst.msk [vmem:[%s226 + $0x48] sm:$0xff] %vm707, %v674
        %718 = vst.msk [vmem:[%s226 + $0x50] sm:$0xff] %vm707, %v679
        %719 = vst.msk [vmem:[%s226 + $0x58] sm:$0xff] %vm707, %v684
        %720 = vst.msk [vmem:[%s226 + $0x60] sm:$0xff] %vm707, %v689
        %721 = vst.msk [vmem:[%s226 + $0x68] sm:$0xff] %vm707, %v694
        %722 = vst.msk [vmem:[%s226 + $0x70] sm:$0xff] %vm707, %v699
        %723 = vst.msk [vmem:[%s226 + $0x78] sm:$0xff] %vm707, %v704
        %s724 = sand.u32 %s134, 1
        %s725 = sand.u32 %s134, 1
        %s726 = smul.addr %s725, 128
        %s727 = scalar_lea.vmem [#allocation2], %s726
        // Predicated region
        $region41: #{_net_forward_impl.1} parent=39 // pred_check
          %p728 = pneg %p144
        $region42: #{_net_forward_impl.1} parent=39 // pred_check_branch
          %730 = sbr.rel (%p728) target = $region44
        $region43: #{_net_forward_impl.1} parent=39 // pred_region
          %s731 = smul.u32 16, %s16
          %s732 = ssub.s32 25, %s731
          %p733 = scmp.lt.s32.totalorder %s732, 16
          %s734 = scalar_select %p733, %s732, 16
          %s735 = smul.u32 128, %s734
          %p736 = scmp.ne.s32.totalorder 0, %s735
          %s737 = smul.addr %s731, 8
          %s738 = scalar_lea.vmem %s5, %s737
          // Predicated region
          $region45: #{_net_forward_impl.1} parent=43 // pred_check
            %p739 = pneg %p736
          $region46: #{_net_forward_impl.1} parent=43 // pred_check_branch
            %741 = sbr.rel (%p739) target = $region48
          $region47: #{_net_forward_impl.1} parent=43 // pred_region
            // Predicated region
            $region49: #{_net_forward_impl.1} parent=47 // pred_check
              _
            $region50: #{_net_forward_impl.1} parent=47 // pred_check_branch
              %743 = sbr.rel (0) target = $region52
            $region51: #{_net_forward_impl.1} parent=47 // pred_region
              // Predicated region
              $region71: #{_net_forward_impl.1} parent=51 // pred_check
                _
              $region72: #{_net_forward_impl.1} parent=51 // pred_check_branch
                %822 = sbr.rel (0) target = $region74
              $region73: #{_net_forward_impl.1} parent=51 // pred_region
                %s823 = sshrl.u32 %s734, 4
                // While loop
                $region75: #{_net_forward_impl.1} parent=73 // loop_pre_header
                  _
                $region76: #{_net_forward_impl.1} parent=73 // loop_header
                  %s825 = sphi 0, %s827
                  %p826 = scmp.ge.s32.totalorder %s825, %s823
                  %s830 = sphi 0, %s867
                  %s831 = sphi %s727, %s870
                  %s832 = sphi %s738, %s871
                $region77: #{_net_forward_impl.1} parent=73 // loop_header_branch
                  %829 = sbr.rel (%p826) target = $region81
                $region78: #{_net_forward_impl.1} parent=73 // loop_body
                  %v833 = vld [vmem:[%s831] sm:$0xff]
                  %834 = vst [vmem:[%s832] sm:$0xff] %v833
                  %v835 = vld [vmem:[%s831 + $0x8] sm:$0xff]
                  %836 = vst [vmem:[%s832 + $0x8] sm:$0xff] %v835
                  %v837 = vld [vmem:[%s831 + $0x10] sm:$0xff]
                  %838 = vst [vmem:[%s832 + $0x10] sm:$0xff] %v837
                  %v839 = vld [vmem:[%s831 + $0x18] sm:$0xff]
                  %840 = vst [vmem:[%s832 + $0x18] sm:$0xff] %v839
                  %v841 = vld [vmem:[%s831 + $0x20] sm:$0xff]
                  %842 = vst [vmem:[%s832 + $0x20] sm:$0xff] %v841
                  %v843 = vld [vmem:[%s831 + $0x28] sm:$0xff]
                  %844 = vst [vmem:[%s832 + $0x28] sm:$0xff] %v843
                  %v845 = vld [vmem:[%s831 + $0x30] sm:$0xff]
                  %846 = vst [vmem:[%s832 + $0x30] sm:$0xff] %v845
                  %v847 = vld [vmem:[%s831 + $0x38] sm:$0xff]
                  %848 = vst [vmem:[%s832 + $0x38] sm:$0xff] %v847
                  %v849 = vld [vmem:[%s831 + $0x40] sm:$0xff]
                  %850 = vst [vmem:[%s832 + $0x40] sm:$0xff] %v849
                  %v851 = vld [vmem:[%s831 + $0x48] sm:$0xff]
                  %852 = vst [vmem:[%s832 + $0x48] sm:$0xff] %v851
                  %v853 = vld [vmem:[%s831 + $0x50] sm:$0xff]
                  %854 = vst [vmem:[%s832 + $0x50] sm:$0xff] %v853
                  %v855 = vld [vmem:[%s831 + $0x58] sm:$0xff]
                  %856 = vst [vmem:[%s832 + $0x58] sm:$0xff] %v855
                  %v857 = vld [vmem:[%s831 + $0x60] sm:$0xff]
                  %858 = vst [vmem:[%s832 + $0x60] sm:$0xff] %v857
                  %v859 = vld [vmem:[%s831 + $0x68] sm:$0xff]
                  %860 = vst [vmem:[%s832 + $0x68] sm:$0xff] %v859
                  %v861 = vld [vmem:[%s831 + $0x70] sm:$0xff]
                  %862 = vst [vmem:[%s832 + $0x70] sm:$0xff] %v861
                  %v863 = vld [vmem:[%s831 + $0x78] sm:$0xff]
                  %864 = vst [vmem:[%s832 + $0x78] sm:$0xff] %v863
                  %s865 = sadd.s32 1, %s830
                  %p866 = scmp.ge.s32.totalorder %s865, %s823
                  %s867 = scalar_select %p866, 0, %s865
                  %s868 = smul.u32 %s867, 128
                  %s869 = smul.u32 %s867, 128
                  %s870 = scalar_lea.vmem %s727, %s868 [#allocation2]
                  %s871 = scalar_lea.vmem %s738, %s869
                $region79: #{_net_forward_impl.1} parent=73 // loop_footer
                  %s827 = sadd.s32 %s825, 1
                $region80: #{_net_forward_impl.1} parent=73 // loop_footer_branch
                  %824 = sbr.rel target = $region76
                $region81: #{_net_forward_impl.1} parent=73 // loop_exit
                  _
                %s872 = sshrl.u32 %s734, 4
                %s873 = sand.u32 %s734, 15
                %s874 = smul.u32 %s872, 16
                %s875 = smul.u32 8, %s874
                %s876 = scalar_lea.vmem %s727, %s875 [#allocation2]
                %s877 = smul.u32 8, %s874
                %s878 = scalar_lea.vmem %s738, %s877
                // While loop
                $region82: #{_net_forward_impl.1} parent=73 // loop_pre_header
                  _
                $region83: #{_net_forward_impl.1} parent=73 // loop_header
                  %s880 = sphi 0, %s882
                  %p881 = scmp.ge.s32.totalorder %s880, %s873
                  %s885 = sphi 0, %s892
                  %s886 = sphi %s876, %s895
                  %s887 = sphi %s878, %s896
                $region84: #{_net_forward_impl.1} parent=73 // loop_header_branch
                  %884 = sbr.rel (%p881) target = $region88
                $region85: #{_net_forward_impl.1} parent=73 // loop_body
                  %v888 = vld [vmem:[%s886] sm:$0xff]
                  %889 = vst [vmem:[%s887] sm:$0xff] %v888
                  %s890 = sadd.s32 1, %s885
                  %p891 = scmp.ge.s32.totalorder %s890, %s873
                  %s892 = scalar_select %p891, 0, %s890
                  %s893 = smul.u32 %s892, 8
                  %s894 = smul.u32 %s892, 8
                  %s895 = scalar_lea.vmem %s876, %s893 [#allocation2]
                  %s896 = scalar_lea.vmem %s878, %s894
                $region86: #{_net_forward_impl.1} parent=73 // loop_footer
                  %s882 = sadd.s32 %s880, 1
                $region87: #{_net_forward_impl.1} parent=73 // loop_footer_branch
                  %879 = sbr.rel target = $region83
                $region88: #{_net_forward_impl.1} parent=73 // loop_exit
                  _
              $region74: #{_net_forward_impl.1} parent=51 // pred_fallthru
                _
              // Predicated region
              $region89: #{_net_forward_impl.1} parent=51 // pred_check
                _
              $region90: #{_net_forward_impl.1} parent=51 // pred_check_branch
                %898 = sbr.rel target = $region92
              $region91: #{_net_forward_impl.1} parent=51 // pred_region
                _
              $region92: #{_net_forward_impl.1} parent=51 // pred_fallthru
                _
            $region52: #{_net_forward_impl.1} parent=47 // pred_fallthru
              _
            // Predicated region
            $region53: #{_net_forward_impl.1} parent=47 // pred_check
              _
            $region54: #{_net_forward_impl.1} parent=47 // pred_check_branch
              %745 = sbr.rel target = $region56
            $region55: #{_net_forward_impl.1} parent=47 // pred_region
              %s747 = sshrl.u32 %s734, 4
              // While loop
              $region57: #{_net_forward_impl.1} parent=55 // loop_pre_header
                _
              $region58: #{_net_forward_impl.1} parent=55 // loop_header
                %s749 = sphi 0, %s751
                %p750 = scmp.ge.s32.totalorder %s749, %s747
                %s754 = sphi 0, %s791
                %s755 = sphi %s727, %s794
                %s756 = sphi %s738, %s795
              $region59: #{_net_forward_impl.1} parent=55 // loop_header_branch
                %753 = sbr.rel (%p750) target = $region63
              $region60: #{_net_forward_impl.1} parent=55 // loop_body
                %v757 = vld [vmem:[%s755] sm:$0xff]
                %758 = vst [vmem:[%s756] sm:$0xff] %v757
                %v759 = vld [vmem:[%s755 + $0x8] sm:$0xff]
                %760 = vst [vmem:[%s756 + $0x8] sm:$0xff] %v759
                %v761 = vld [vmem:[%s755 + $0x10] sm:$0xff]
                %762 = vst [vmem:[%s756 + $0x10] sm:$0xff] %v761
                %v763 = vld [vmem:[%s755 + $0x18] sm:$0xff]
                %764 = vst [vmem:[%s756 + $0x18] sm:$0xff] %v763
                %v765 = vld [vmem:[%s755 + $0x20] sm:$0xff]
                %766 = vst [vmem:[%s756 + $0x20] sm:$0xff] %v765
                %v767 = vld [vmem:[%s755 + $0x28] sm:$0xff]
                %768 = vst [vmem:[%s756 + $0x28] sm:$0xff] %v767
                %v769 = vld [vmem:[%s755 + $0x30] sm:$0xff]
                %770 = vst [vmem:[%s756 + $0x30] sm:$0xff] %v769
                %v771 = vld [vmem:[%s755 + $0x38] sm:$0xff]
                %772 = vst [vmem:[%s756 + $0x38] sm:$0xff] %v771
                %v773 = vld [vmem:[%s755 + $0x40] sm:$0xff]
                %774 = vst [vmem:[%s756 + $0x40] sm:$0xff] %v773
                %v775 = vld [vmem:[%s755 + $0x48] sm:$0xff]
                %776 = vst [vmem:[%s756 + $0x48] sm:$0xff] %v775
                %v777 = vld [vmem:[%s755 + $0x50] sm:$0xff]
                %778 = vst [vmem:[%s756 + $0x50] sm:$0xff] %v777
                %v779 = vld [vmem:[%s755 + $0x58] sm:$0xff]
                %780 = vst [vmem:[%s756 + $0x58] sm:$0xff] %v779
                %v781 = vld [vmem:[%s755 + $0x60] sm:$0xff]
                %782 = vst [vmem:[%s756 + $0x60] sm:$0xff] %v781
                %v783 = vld [vmem:[%s755 + $0x68] sm:$0xff]
                %784 = vst [vmem:[%s756 + $0x68] sm:$0xff] %v783
                %v785 = vld [vmem:[%s755 + $0x70] sm:$0xff]
                %786 = vst [vmem:[%s756 + $0x70] sm:$0xff] %v785
                %v787 = vld [vmem:[%s755 + $0x78] sm:$0xff]
                %788 = vst [vmem:[%s756 + $0x78] sm:$0xff] %v787
                %s789 = sadd.s32 1, %s754
                %p790 = scmp.ge.s32.totalorder %s789, %s747
                %s791 = scalar_select %p790, 0, %s789
                %s792 = smul.u32 %s791, 128
                %s793 = smul.u32 %s791, 128
                %s794 = scalar_lea.vmem %s727, %s792 [#allocation2]
                %s795 = scalar_lea.vmem %s738, %s793
              $region61: #{_net_forward_impl.1} parent=55 // loop_footer
                %s751 = sadd.s32 %s749, 1
              $region62: #{_net_forward_impl.1} parent=55 // loop_footer_branch
                %748 = sbr.rel target = $region58
              $region63: #{_net_forward_impl.1} parent=55 // loop_exit
                _
              %s796 = sshrl.u32 %s734, 4
              %s797 = sand.u32 %s734, 15
              %s798 = smul.u32 %s796, 16
              %s799 = smul.u32 8, %s798
              %s800 = scalar_lea.vmem %s727, %s799 [#allocation2]
              %s801 = smul.u32 8, %s798
              %s802 = scalar_lea.vmem %s738, %s801
              // While loop
              $region64: #{_net_forward_impl.1} parent=55 // loop_pre_header
                _
              $region65: #{_net_forward_impl.1} parent=55 // loop_header
                %s804 = sphi 0, %s806
                %p805 = scmp.ge.s32.totalorder %s804, %s797
                %s809 = sphi 0, %s816
                %s810 = sphi %s800, %s819
                %s811 = sphi %s802, %s820
              $region66: #{_net_forward_impl.1} parent=55 // loop_header_branch
                %808 = sbr.rel (%p805) target = $region70
              $region67: #{_net_forward_impl.1} parent=55 // loop_body
                %v812 = vld [vmem:[%s810] sm:$0xff]
                %813 = vst [vmem:[%s811] sm:$0xff] %v812
                %s814 = sadd.s32 1, %s809
                %p815 = scmp.ge.s32.totalorder %s814, %s797
                %s816 = scalar_select %p815, 0, %s814
                %s817 = smul.u32 %s816, 8
                %s818 = smul.u32 %s816, 8
                %s819 = scalar_lea.vmem %s800, %s817 [#allocation2]
                %s820 = scalar_lea.vmem %s802, %s818
              $region68: #{_net_forward_impl.1} parent=55 // loop_footer
                %s806 = sadd.s32 %s804, 1
              $region69: #{_net_forward_impl.1} parent=55 // loop_footer_branch
                %803 = sbr.rel target = $region65
              $region70: #{_net_forward_impl.1} parent=55 // loop_exit
                _
            $region56: #{_net_forward_impl.1} parent=47 // pred_fallthru
              _
          $region48: #{_net_forward_impl.1} parent=43 // pred_fallthru
            _
          %899 = vnop
        $region44: #{_net_forward_impl.1} parent=39 // pred_fallthru
          _
      $region40: #{_net_forward_impl.1} parent=5 // pred_fallthru
        _
      %p900 = scmp.le.s32.totalorder 2, %s11
      // Predicated region
      $region93: #{_net_forward_impl.1} parent=5 // pred_check
        %p901 = pneg %p900
      $region94: #{_net_forward_impl.1} parent=5 // pred_check_branch
        %903 = sbr.rel (%p901) target = $region96
      $region95: #{_net_forward_impl.1} parent=5 // pred_region
        %s904 = ssub.s32 %s11, 2
        // Predicated region
        $region97: #{_net_forward_impl.1} parent=95 // pred_check
          %p905 = pneg %p150
        $region98: #{_net_forward_impl.1} parent=95 // pred_check_branch
          %907 = sbr.rel (%p905) target = $region100
        $region99: #{_net_forward_impl.1} parent=95 // pred_region
          %s908 = sand.u32 %s135, 1
          %s909 = sand.u32 %s135, 1
          %s910 = smul.addr %s909, 128
          %s911 = scalar_lea.vmem [#allocation2], %s910
        $region100: #{_net_forward_impl.1} parent=95 // pred_fallthru
          _
      $region96: #{_net_forward_impl.1} parent=5 // pred_fallthru
        _
    $region6: #{_net_forward_impl.1} parent=1 // loop_footer
      %s15 = sadd.s32 1, %s11
    $region7: #{_net_forward_impl.1} parent=1 // loop_footer_branch
      %10 = sbr.rel target = $region3
    $region8: #{_net_forward_impl.1} parent=1 // loop_exit
      _

</llo_original>
